<compile_context>
chip_gen: v5e
topology: v5e:2x2
jax: 0.10.0
libtpu: 0.0.40
codegen_flags: <defaults>
</compile_context>

<pallas_src>
import functools

import jax
import jax.numpy as jnp
from jax.experimental import pallas as pl
from jax.experimental.pallas import tpu as pltpu

Z_DIM = 16            # latent dim (module parameter; chosen small)
NGF = 64              # hard-coded in the PyTorch module
OUT_CHANNELS = 3
K = 4                 # all kernels are 4x4
BN_EPS = 1e-5
VMEM_LIMIT = 28 * 1024 * 1024

# 3x3 window offsets (dy, dx) of the phase-decomposed transposed conv,
# dy-major.  The row-block order of the preprocessed B matrices matches this.
_WINDOW_OFFSETS = tuple((dy, dx) for dy in (-1, 0, 1) for dx in (-1, 0, 1))

# Set at startup by _init_roll_convention(): True if pltpu.roll follows
# jnp.roll semantics (result[i] = x[(i - shift) mod n]).
_ROLL_LIKE_JNP = True


def _init_roll_convention():
    """One-time runtime self-check of pltpu.roll's rotation direction."""
    global _ROLL_LIKE_JNP

    def kernel(x_ref, o_ref):
        o_ref[...] = pltpu.roll(x_ref[...], 1, axis=0)

    x = jnp.arange(8 * 128, dtype=jnp.float32).reshape(8, 128)
    y = pl.pallas_call(
        kernel,
        out_shape=jax.ShapeDtypeStruct((8, 128), jnp.float32),
        grid=(1,),
        in_specs=[pl.BlockSpec((8, 128), lambda i: (0, 0))],
        out_specs=pl.BlockSpec((8, 128), lambda i: (0, 0)),
    )(x)
    _ROLL_LIKE_JNP = bool(jnp.array_equal(y, jnp.roll(x, 1, axis=0)))


# ----------------------------- in-kernel helpers ----------------------------

def _pool_groups(v, group, ngroups):
    """v: (1, group*ngroups).  Per lane, sum over the `ngroups` lanes sharing
    the same within-group offset (log-step cyclic lane rolls on the XLU)."""
    shift = group
    while shift < group * ngroups:
        v = v + pltpu.roll(v, shift, axis=1)
        shift *= 2
    return v


def _bn(y, gamma_row, beta_row, *, group, ngroups, count):
    """Fused training-mode BatchNorm2d: each output channel occupies `ngroups`
    column groups of width `group`.  Single-pass E[y^2]-mean^2 in f32 is fine
    at these magnitudes (unit-scale normalized activations)."""
    cs = _pool_groups(jnp.sum(y, axis=0, keepdims=True), group, ngroups)
    css = _pool_groups(jnp.sum(y * y, axis=0, keepdims=True), group, ngroups)
    inv = 1.0 / float(count)
    mean = cs * inv
    var = jnp.maximum(css * inv - mean * mean, 0.0)
    scale = jax.lax.rsqrt(var + BN_EPS) * gamma_row
    return (y - mean) * scale + beta_row


def _gather_dot(x, b_ref, *, h, w):
    """Phase-decomposed ConvTranspose2d(k=4, s=2, p=1) as 9 accumulating MXU
    dots over in-VMEM shifted copies of the activation (row = pixel (n,h,w),
    lane = channel).  No HBM im2col, no zero-dilated input, ~0% wasted MACs."""
    rows, cin = x.shape
    ncols = b_ref.shape[1]
    hw = h * w
    ri = jax.lax.broadcasted_iota(jnp.int32, (rows, 1), 0)
    hh = (ri % hw) // w
    ww = ri % w
    acc = jnp.zeros((rows, ncols), jnp.float32)
    for wi, (dy, dx) in enumerate(_WINDOW_OFFSETS):
        d = dy * w + dx                       # row delta of the (dy,dx) tap
        if d == 0:
            xs = x
        else:
            shift = (-d) % rows if _ROLL_LIKE_JNP else d % rows
            xs = pltpu.roll(x, shift, axis=0)     # xs[i] = x[(i + d) mod rows]
        valid = ((hh + dy >= 0) & (hh + dy < h) &
                 (ww + dx >= 0) & (ww + dx < w))
        xw = jnp.where(valid, xs, 0.0).astype(jnp.bfloat16)
        acc = acc + jnp.dot(xw, b_ref[wi * cin:(wi + 1) * cin, :],
                            preferred_element_type=jnp.float32)
    return acc


# --------------------------------- kernels ----------------------------------

def _l01_kernel(a2_ref, b0_ref, g0_ref, bt0_ref, b1_ref, g1_ref, bt1_ref,
                o_ref):
    m = a2_ref.shape[0]                                   # N * 4 * 4
    # layer 0: 1x1 ConvTranspose == matmul; rows already ordered (n, h, w).
    x0 = jnp.dot(a2_ref[...], b0_ref[...],
                 preferred_element_type=jnp.float32)      # (m, 512) f32
    x0 = _bn(x0, g0_ref[...], bt0_ref[...],
             group=x0.shape[1], ngroups=1, count=m)
    # nn.LeakyReLU(True): True binds negative_slope == 1.0 -> identity.
    # layer 1: phase-decomposed ConvTranspose2d(512, 256, 4, 2, 1) + fused BN.
    y = _gather_dot(x0, b1_ref, h=K, w=K)                 # (m, 4*256) f32
    y = _bn(y, g1_ref[...], bt1_ref[...],
            group=o_ref.shape[1] // 4, ngroups=4, count=4 * m)
    o_ref[...] = y.astype(o_ref.dtype)


def _convt_bn_kernel(x_ref, b_ref, g_ref, bt_ref, o_ref, *, h, w):
    x = x_ref[...].astype(jnp.float32)
    y = _gather_dot(x, b_ref, h=h, w=w)
    y = _bn(y, g_ref[...], bt_ref[...],
            group=o_ref.shape[1] // 4, ngroups=4, count=4 * x_ref.shape[0])
    o_ref[...] = y.astype(o_ref.dtype)


def _convt_tanh_kernel(x_ref, b_ref, o_ref, *, h, w):
    x = x_ref[...].astype(jnp.float32)
    y = _gather_dot(x, b_ref, h=h, w=w)
    o_ref[...] = jnp.tanh(y).astype(o_ref.dtype)


# ------------------------------ pallas wrappers ------------------------------

def _resident_spec(shape):
    """Full-array, VMEM-resident, single-buffered operand for grid=(1,)."""
    zeros = (0,) * len(shape)
    return pl.BlockSpec(shape, lambda i: zeros, pipeline_mode=pl.Buffered(1))


def _fused_l01(a2, pp):
    m = a2.shape[0]
    gcols = pp["b1"].shape[1]
    return pl.pallas_call(
        _l01_kernel,
        out_shape=jax.ShapeDtypeStruct((m, gcols), jnp.bfloat16),
        grid=(1,),
        in_specs=[_resident_spec(a2.shape),
                  _resident_spec(pp["b0"].shape),
                  _resident_spec(pp["g0"].shape),
                  _resident_spec(pp["bt0"].shape),
                  _resident_spec(pp["b1"].shape),
                  _resident_spec(pp["g1"].shape),
                  _resident_spec(pp["bt1"].shape)],
        out_specs=_resident_spec((m, gcols)),
        compiler_params=pltpu.CompilerParams(
            dimension_semantics=("arbitrary",),
            vmem_limit_bytes=VMEM_LIMIT),
    )(a2, pp["b0"], pp["g0"], pp["bt0"], pp["b1"], pp["g1"], pp["bt1"])


# TODO(synk): for batch sizes >> 16, tile M with an "arbitrary" grid axis and a
# two-pass BN (stats accumulated in VMEM scratch); the single-block-A design
# below is sized for small inference batches.
def _convt_bn(x, b, g, bt, *, h, w):
    m, gcols = x.shape[0], b.shape[1]
    return pl.pallas_call(
        functools.partial(_convt_bn_kernel, h=h, w=w),
        out_shape=jax.ShapeDtypeStruct((m, gcols), jnp.bfloat16),
        grid=(1,),
        in_specs=[_resident_spec(x.shape), _resident_spec(b.shape),
                  _resident_spec(g.shape), _resident_spec(bt.shape)],
        out_specs=_resident_spec((m, gcols)),
        compiler_params=pltpu.CompilerParams(
            dimension_semantics=("arbitrary",),
            vmem_limit_bytes=VMEM_LIMIT),
    )(x, b, g, bt)


def _convt_tanh(x, b, *, h, w, n):
    hw = h * w
    gcols = b.shape[1]
    return pl.pallas_call(
        functools.partial(_convt_tanh_kernel, h=h, w=w),
        out_shape=jax.ShapeDtypeStruct((n * hw, gcols), jnp.float32),
        grid=(n,),                                   # one image per step
        in_specs=[pl.BlockSpec((hw, x.shape[1]), lambda i: (i, 0)),
                  pl.BlockSpec(b.shape, lambda i: (0, 0),
                               pipeline_mode=pl.Buffered(1))],
        out_specs=pl.BlockSpec((hw, gcols), lambda i: (i, 0)),
        compiler_params=pltpu.CompilerParams(
            dimension_semantics=("parallel",),
            vmem_limit_bytes=VMEM_LIMIT),
    )(x, b)


# ------------------------------ JAX glue (cheap) -----------------------------

def _interleave_phases(y, n, h, w, cout):
    """y: (N*H*W, 4*Cout) phase-separated (col = (2r+c)*Cout + co)
    -> interleaved (N, 2H, 2W, Cout).  Small (<0.5 MiB) XLA reshape."""
    t = y.reshape(n, h, w, 2, 2, cout)
    t = jnp.transpose(t, (0, 1, 3, 2, 4, 5))
    return t.reshape(n, 2 * h, 2 * w, cout)


# --------------------------- parameter preprocessing -------------------------

def _convT_phase_weight(w):
    """torch ConvTranspose2d weight (Cin, Cout, 4, 4), stride 2, padding 1 ->
    B (9*Cin, 4*Cout).  Row block widx = (dy+1)*3+(dx+1) holds the tap
    w[:, :, r+1-2dy, c+1-2dx] at columns (2r+c)*Cout (zero where the tap
    falls outside the 4x4 kernel)."""
    cin, cout, kh, kw = w.shape
    assert kh == K and kw == K
    blocks = []
    for dy, dx in _WINDOW_OFFSETS:
        blk = jnp.zeros((cin, 4 * cout), jnp.float32)
        for r in (0, 1):
            for c in (0, 1):
                ky, kx = r + 1 - 2 * dy, c + 1 - 2 * dx
                if 0 <= ky < K and 0 <= kx < K:
                    p = 2 * r + c
                    blk = blk.at[:, p * cout:(p + 1) * cout].set(w[:, :, ky, kx])
        blocks.append(blk)
    return jnp.concatenate(blocks, axis=0)


def init_params(key, z_dim=Z_DIM, ngf=NGF, out_channels=OUT_CHANNELS):
    chans = [(z_dim, ngf * 8), (ngf * 8, ngf * 4), (ngf * 4, ngf * 2),
             (ngf * 2, ngf), (ngf, out_channels)]
    params = {}
    for li, (ci, co) in enumerate(chans):
        key, k1, k2, k3 = jax.random.split(key, 4)
        params[f"w{li}"] = 0.02 * jax.random.normal(k1, (ci, co, K, K),
                                                    jnp.float32)
        if li < 4:   # last conv is followed by Tanh, no BN
            params[f"gamma{li}"] = 1.0 + 0.1 * jax.random.normal(
                k2, (co,), jnp.float32)
            params[f"beta{li}"] = 0.1 * jax.random.normal(k3, (co,),
                                                          jnp.float32)
    return params


def preprocess_params(params):
    """One-time weight preprocessing (hoisted out of the forward pass)."""
    pp = {}
    w0 = params["w0"]                                     # (z_dim, 512, 4, 4)
    zdim, c0 = w0.shape[0], w0.shape[1]
    # layer 0 weight laid out so that rows of the output are (n, h, w):
    # B0[(h*4+w)*z_dim + k, c] = w0[k, c, h, w]
    pp["b0"] = jnp.transpose(w0, (2, 3, 0, 1)).reshape(
        K * K * zdim, c0).astype(jnp.bfloat16)
    pp["g0"] = params["gamma0"].reshape(1, -1).astype(jnp.float32)
    pp["bt0"] = params["beta0"].reshape(1, -1).astype(jnp.float32)
    for li in range(1, 5):
        b = _convT_phase_weight(params[f"w{li}"])
        if li == 4:                      # pad 4*Cout = 12 -> 128 lane-dense
            b = jnp.zeros((b.shape[0], 128), b.dtype).at[:, :b.shape[1]].set(b)
        pp[f"b{li}"] = b.astype(jnp.bfloat16)
        if li < 4:
            pp[f"g{li}"] = jnp.tile(params[f"gamma{li}"], 4).reshape(
                1, -1).astype(jnp.float32)
            pp[f"bt{li}"] = jnp.tile(params[f"beta{li}"], 4).reshape(
                1, -1).astype(jnp.float32)
    return pp


# ---------------------------------- forward ----------------------------------

def generator_forward(z, pp):
    n, zdim = z.shape
    # Layer-0 LHS: block-diagonal placement of z so that the matmul's output
    # rows are already (n, h, w) pixels -- removes a risky in-kernel reshape.
    eye = jnp.eye(K * K, dtype=jnp.float32)
    a2 = (eye[None, :, :, None] * z[:, None, None, :]).reshape(
        n * K * K, K * K * zdim).astype(jnp.bfloat16)

    y = _fused_l01(a2, pp)                                     # (n*16, 4*256)
    x = _interleave_phases(y, n, 4, 4, NGF * 4).reshape(n * 64, NGF * 4)
    y = _convt_bn(x, pp["b2"], pp["g2"], pp["bt2"], h=8, w=8)  # (n*64, 4*128)
    x = _interleave_phases(y, n, 8, 8, NGF * 2).reshape(n * 256, NGF * 2)
    y = _convt_bn(x, pp["b3"], pp["g3"], pp["bt3"], h=16, w=16)  # (n*256, 4*64)
    x = _interleave_phases(y, n, 16, 16, NGF).reshape(n * 1024, NGF)
    y = _convt_tanh(x, pp["b4"], h=32, w=32, n=n)              # (n*1024, 128)
    img = _interleave_phases(y[:, :4 * OUT_CHANNELS], n, 32, 32, OUT_CHANNELS)
    return jnp.transpose(img, (0, 3, 1, 2))                    # NCHW like torch


# ---------------------------- pure-JAX reference -----------------------------

def _ref_convT_s2(x, w):
    """PyTorch ConvTranspose2d(Cin, Cout, 4, stride=2, padding=1, bias=False)."""
    wf = jnp.transpose(jnp.flip(w, axis=(2, 3)), (1, 0, 2, 3))   # OIHW, flipped
    return jax.lax.conv_general_dilated(
        x, wf, window_strides=(1, 1), padding=((2, 2), (2, 2)),
        lhs_dilation=(2, 2), dimension_numbers=("NCHW", "OIHW", "NCHW"),
        precision=jax.lax.Precision.HIGHEST)


def _ref_bn(x, gamma, beta):
    mean = jnp.mean(x, axis=(0, 2, 3), keepdims=True)
    var = jnp.mean(jnp.square(x - mean), axis=(0, 2, 3), keepdims=True)
    xn = (x - mean) * jax.lax.rsqrt(var + BN_EPS)
    return xn * gamma[None, :, None, None] + beta[None, :, None, None]


def reference_forward(z, params):
    x = jnp.einsum("nk,kchw->nchw", z, params["w0"],
                   precision=jax.lax.Precision.HIGHEST)          # (N,512,4,4)
    x = _ref_bn(x, params["gamma0"], params["beta0"])            # LeakyReLU(True)=id
    for li in range(1, 5):
        x = _ref_convT_s2(x, params[f"w{li}"])
        if li < 4:
            x = _ref_bn(x, params[f"gamma{li}"], params[f"beta{li}"])
        else:
            x = jnp.tanh(x)
    return x


# ------------------------------------ main -----------------------------------

if __name__ == "__main__":
    _init_roll_convention()

    key = jax.random.PRNGKey(0)
    kp, kz = jax.random.split(key)
    params = init_params(kp)
    pp = jax.jit(preprocess_params)(params)                 # one-time hoist
    z = jax.random.normal(kz, (2, Z_DIM), jnp.float32)      # batch of latents

    out = jax.jit(generator_forward)(z, pp)
    out = jax.block_until_ready(out)

    assert out.shape == (2, OUT_CHANNELS, 64, 64), out.shape
    assert bool(jnp.all(jnp.isfinite(out)))
    assert float(jnp.max(jnp.abs(out))) <= 1.0 + 1e-5       # tanh range

    ref = jax.block_until_ready(jax.jit(reference_forward)(z, params))
    max_err = float(jnp.max(jnp.abs(out - ref)))
    assert max_err < 0.2, f"mismatch vs pure-JAX reference: {max_err}"

    print("KERNEL_OK")
</pallas_src>

<mosaic_0001>
module attributes {stable_mosaic.version = 11 : i64} {
  func.func @kernel(%arg0: i32, %arg1: memref<8x128xf32, #tpu.memory_space<vmem>>, %arg2: memref<8x128xf32, #tpu.memory_space<vmem>>) attributes {dimension_semantics = [#tpu.dimension_semantics<arbitrary>], iteration_bounds = array<i64: 1>, scalar_prefetch = 0 : i64, scratch_operands = 0 : i64, tpu.core_type = #tpu.core_type<tc>, window_params = [{pipeline_mode = #tpu.pipeline_mode<synchronous>, transform_indices = @transform_0, window_bounds = array<i64: 8, 128>}, {pipeline_mode = #tpu.pipeline_mode<synchronous>, transform_indices = @transform_1, window_bounds = array<i64: 8, 128>}]} {
    %c0 = arith.constant 0 : index
    %c0_0 = arith.constant 0 : index
    %0 = vector.load %arg1[%c0, %c0_0] : memref<8x128xf32, #tpu.memory_space<vmem>>, vector<8x128xf32>
    %c1_i32 = arith.constant 1 : i32
    %1 = tpu.dynamic_rotate %0 by %c1_i32 dim 0 : vector<8x128xf32>, i32 -> vector<8x128xf32>
    %c0_1 = arith.constant 0 : index
    %c0_2 = arith.constant 0 : index
    %2 = vector.load %arg2[%c0_1, %c0_2] : memref<8x128xf32, #tpu.memory_space<vmem>>, vector<8x128xf32>
    tpu.vector_store %arg2[%c0_1, %c0_2], %1 {strides = array<i32>} : memref<8x128xf32, #tpu.memory_space<vmem>>, vector<8x128xf32>,
    return
  }
  func.func @transform_0(%arg0: i32) -> (i32, i32) {
    %c0_i32 = arith.constant 0 : i32
    %c0_i32_0 = arith.constant 0 : i32
    %c0_i32_1 = arith.constant 0 : i32
    return %c0_i32, %c0_i32_0 : i32, i32
  }
  func.func @transform_1(%arg0: i32) -> (i32, i32) {
    %c0_i32 = arith.constant 0 : i32
    %c0_i32_0 = arith.constant 0 : i32
    %c0_i32_1 = arith.constant 0 : i32
    return %c0_i32, %c0_i32_0 : i32, i32
  }
}

</mosaic_0001>

<llo_original>
// kernel: tpu_custom_call.1
$region0: #{tpu_custom_call.1}
  #allocation0 [shape = 'u32[]', space=smem, size = 0x4, offset = 0x4, fixed_abs, tag = 'smem constant byte address 0x4 - core index']
  #allocation1 [shape = 'u32[72,128]{1,0:T(1,128)}', space=vmem, size = 0x9000, scoped, tag = 'internal scratch']
  %s0 = inlined_call_operand.hbm [shape: f32[8,128], index: 0, kind: input, shape index: {}]
  %s1 = inlined_call_operand.hbm [shape: f32[8,128], index: 1, kind: output, shape index: {}]
  %s2 = sld [smem:[#allocation0]]
  $region18: #{tpu_custom_call.1} parent=0
    _
  %s4 = ssub.s32 1, %s2
  %s5 = scalar_select 0, %s4, %s2
  $region1: #{tpu_custom_call.1} parent=0
    #allocation2 [shape = 'u8[4096]{0}', space=vmem, size = 0x1000, scoped, tag = 'input window, operand 0, single buffered']
    #allocation3 [shape = 's32[1]{0}', space=sflag, size = 0x4, scoped, tag = 'scoped memory for tpu_custom_call.1']
    #allocation4 [shape = 's32[1]{0}', space=sflag, size = 0x4, scoped, tag = 'scoped memory for tpu_custom_call.1']
    #allocation5 [shape = 'u8[4096]{0}', space=vmem, size = 0x1000, scoped, tag = 'output window, operand 0, single buffered']
    %6 = vsyncpa [#allocation3], 0
    %7 = vsyncpa [#allocation4], 0
    // Predicated region
    $region2: #{tpu_custom_call.1} parent=1 // pred_check
      _
    $region3: #{tpu_custom_call.1} parent=1 // pred_check_branch
      %9 = sbr.rel (0) target = $region5
    $region4: #{tpu_custom_call.1} parent=1 // pred_region
      %11 = vsyncadd [#allocation3], 0
      %s13 = sshll.u32 %s0, 4
      %s14 = int_to_ptr.hbm [resolvable:$true] %s13
      %s15 = sshll.u32 [#allocation2], 4
      %s16 = int_to_ptr.vmem [resolvable:$true] %s15
      %18 = dma.hbm_to_vmem [thread:$0]  %s14, 128, %s16, [#allocation3]
    $region5: #{tpu_custom_call.1} parent=1 // pred_fallthru
      _
    // Predicated region
    $region6: #{tpu_custom_call.1} parent=1 // pred_check
      _
    $region7: #{tpu_custom_call.1} parent=1 // pred_check_branch
      %20 = sbr.rel (0) target = $region9
    $region8: #{tpu_custom_call.1} parent=1 // pred_region
      %22 = dma.done [#allocation3], 128
    $region9: #{tpu_custom_call.1} parent=1 // pred_fallthru
      _
    %v23 = vld [vmem:[#allocation2] sm:$0xff]
    %v24 = vrot.slane %v23, 7
    %25 = vst [vmem:[#allocation5] sm:$0xff] %v24
    // Predicated region
    $region10: #{tpu_custom_call.1} parent=1 // pred_check
      _
    $region11: #{tpu_custom_call.1} parent=1 // pred_check_branch
      %27 = sbr.rel (0) target = $region13
    $region12: #{tpu_custom_call.1} parent=1 // pred_region
      %29 = vsyncadd [#allocation4], 0
      %s31 = sshll.u32 [#allocation5], 4
      %s32 = int_to_ptr.vmem [resolvable:$true] %s31
      %s33 = sshll.u32 %s1, 4
      %s34 = int_to_ptr.hbm [resolvable:$true] %s33
      %36 = dma.vmem_to_hbm [thread:$0]  %s32, 128, %s34, [#allocation4]
    $region13: #{tpu_custom_call.1} parent=1 // pred_fallthru
      _
    // Predicated region
    $region14: #{tpu_custom_call.1} parent=1 // pred_check
      _
    $region15: #{tpu_custom_call.1} parent=1 // pred_check_branch
      %38 = sbr.rel (0) target = $region17
    $region16: #{tpu_custom_call.1} parent=1 // pred_region
      %40 = dma.done [#allocation4], 128
    $region17: #{tpu_custom_call.1} parent=1 // pred_fallthru
      _
    %41 = vsyncpa [#allocation3], 1
    %42 = vsyncpa [#allocation4], 1

</llo_original>
